<compile_context>
chip_gen: v5e
topology: v5e:2x2
jax: 0.10.0
libtpu: 0.0.40
codegen_flags: <defaults>
</compile_context>

<pallas_src>
import functools

import jax
import jax.numpy as jnp
from jax.experimental import pallas as pl
from jax.experimental.pallas import tpu as pltpu


def _round_up(x, m):
    return ((x + m - 1) // m) * m


def _vmem_budget_bytes():
    """Physical VMEM per core (trace-time query; conservative fallback)."""
    try:
        info = pltpu.get_tpu_info()
        cap = getattr(info, "vmem_capacity_bytes", None)
        if cap:
            return int(cap)
    except Exception:
        pass
    return 64 * 1024 * 1024  # v7x-sized conservative default


def _concat_weights(w, in_p, out_p):
    """(A, Fin, H) -> (in_p, A*out_p), zero padded; column block a holds W[a].

    This is a tiny parameter-sized reshape (unlike the removed adjacency
    transpose) so doing it wrapper-side is negligible.
    """
    a, fin, h = w.shape
    w_pad = jnp.pad(w.astype(jnp.float32),
                    ((0, 0), (0, in_p - fin), (0, out_p - h)))
    return jnp.transpose(w_pad, (1, 0, 2)).reshape(in_p, a * out_p)


# --------------------------------------------------------------------------
# Kernels
# --------------------------------------------------------------------------
def _layer_body(num_adjs, h_pad, h, w_cat, b, adj_ref):
    """ReLU( sum_a adj[a] @ (h @ W[a]) + b ) with f32 accumulation.

    One wide-N MXU matmul builds all relations' supports in a single call;
    the relation sum is accumulated per relation straight from adj_ref.
    supp / acc stay as live f32 values (no scratch store/reload, no bf16
    re-quantization of the intermediate).
    """
    supp = jnp.dot(h, w_cat, preferred_element_type=jnp.float32)  # (n, A*h_pad)
    acc = jnp.dot(adj_ref[0], supp[:, :h_pad],
                  preferred_element_type=jnp.float32)
    for a in range(1, num_adjs):  # static unroll, A is tiny
        acc = acc + jnp.dot(adj_ref[a], supp[:, a * h_pad:(a + 1) * h_pad],
                            preferred_element_type=jnp.float32)
    return jnp.maximum(acc + b, 0.0)


def _fused_gcn_kernel(num_adjs, h_pad,
                      x_ref, w1_ref, b1_ref, w2_ref, b2_ref, adj_ref, o_ref):
    """Both GCN layers fused in one grid step (small-graph path); the
    intermediate x1 never leaves VMEM/vregs."""
    x1 = _layer_body(num_adjs, h_pad, x_ref[...], w1_ref[...], b1_ref[...],
                     adj_ref)
    x2 = _layer_body(num_adjs, h_pad, x1, w2_ref[...], b2_ref[...], adj_ref)
    o_ref[...] = x2.astype(o_ref.dtype)


def _layer_gcn_kernel(num_adjs, h_pad,
                      h_ref, wcat_ref, b_ref, adj_ref, o_ref):
    """One GCN layer, one output-row tile per grid step (large-graph path)."""
    out = _layer_body(num_adjs, h_pad, h_ref[...], wcat_ref[...], b_ref[...],
                      adj_ref)
    o_ref[...] = out.astype(o_ref.dtype)


# --------------------------------------------------------------------------
# pallas_call wrappers
# --------------------------------------------------------------------------
def _run_fused(x_p, w1_cat, b1_v, w2_cat, b2_v, adjs, out_dtype, vmem_limit):
    A, N, _ = adjs.shape
    fin_p = x_p.shape[1]
    h_p = b1_v.shape[1]
    kernel = functools.partial(_fused_gcn_kernel, A, h_p)
    return pl.pallas_call(
        kernel,
        out_shape=jax.ShapeDtypeStruct((N, h_p), out_dtype),
        grid_spec=pltpu.PrefetchScalarGridSpec(
            num_scalar_prefetch=0,
            grid=(1,),
            in_specs=[
                pl.BlockSpec((N, fin_p), lambda i: (0, 0)),        # x
                pl.BlockSpec((fin_p, A * h_p), lambda i: (0, 0)),  # W1 (col-concat)
                pl.BlockSpec((1, h_p), lambda i: (0, 0)),          # b1
                pl.BlockSpec((h_p, A * h_p), lambda i: (0, 0)),    # W2 (col-concat)
                pl.BlockSpec((1, h_p), lambda i: (0, 0)),          # b2
                pl.BlockSpec((A, N, N), lambda i: (0, 0, 0)),      # adjacencies, as-is
            ],
            out_specs=pl.BlockSpec((N, h_p), lambda i: (0, 0)),
        ),
        compiler_params=pltpu.CompilerParams(
            dimension_semantics=("arbitrary",),
            vmem_limit_bytes=vmem_limit),
    )(x_p, w1_cat, b1_v, w2_cat, b2_v, adjs)


def _run_layer_tiled(h, w_cat, b_v, adjs, row_tile, out_dtype, vmem_limit):
    A, N, _ = adjs.shape
    fin_p = h.shape[1]
    h_p = b_v.shape[1]
    rows_p = _round_up(N, row_tile)
    adj_in = adjs
    if rows_p != N:
        # TODO(synk): for N not divisible by row_tile this zero pad re-writes
        # the adjacency; pick a divisor tile or support a ragged last tile to
        # avoid the extra HBM pass.
        adj_in = jnp.pad(adjs, ((0, 0), (0, rows_p - N), (0, 0)))
    kernel = functools.partial(_layer_gcn_kernel, A, h_p)
    out = pl.pallas_call(
        kernel,
        out_shape=jax.ShapeDtypeStruct((rows_p, h_p), out_dtype),
        grid_spec=pltpu.PrefetchScalarGridSpec(
            num_scalar_prefetch=0,
            grid=(rows_p // row_tile,),
            in_specs=[
                # Grid-invariant operands (constant block index -> fetched once
                # and kept resident by the pipeline).
                # TODO(synk): single-buffer these via pipeline_mode=pl.Buffered(1)
                # to free extra VMEM headroom on v7x once validated on the
                # target jax/libtpu version (they are small, so the default
                # double buffer is currently affordable).
                pl.BlockSpec((N, fin_p), lambda i: (0, 0)),        # h (all rows)
                pl.BlockSpec((fin_p, A * h_p), lambda i: (0, 0)),  # W (col-concat)
                pl.BlockSpec((1, h_p), lambda i: (0, 0)),          # bias
                # Only the quadratic operand streams: one row tile per step,
                # double-buffered -> DMA overlaps the matmuls.
                pl.BlockSpec((A, row_tile, N), lambda i: (0, i, 0)),
            ],
            out_specs=pl.BlockSpec((row_tile, h_p), lambda i: (i, 0)),
        ),
        compiler_params=pltpu.CompilerParams(
            # Row tiles are independent -> megacore-shardable on v7x.
            dimension_semantics=("parallel",),
            vmem_limit_bytes=vmem_limit),
    )(h, w_cat, b_v, adj_in)
    return out[:N]


def _pick_row_tile(A, N, fin_p, h_p, vmem_limit):
    """Largest power-of-two row tile whose working set fits the VMEM budget.

    Per grid step the tiled layer holds: resident h (N, fin_p) and the live
    supp value (N, A*h_p), plus a double-buffered (A, row_tile, N) adjacency
    tile and the (row_tile, h_p) output tile.
    """
    budget = int(0.6 * vmem_limit)
    resident = (2 * N * fin_p + N * A * h_p + 2 * fin_p * A * h_p) * 4
    tm = 1024
    while tm > 64 and resident + (2 * A * tm * N + 2 * tm * h_p) * 4 > budget:
        tm //= 2
    # TODO(synk): for N so large that the resident h/supp themselves overflow
    # VMEM, add a second (column / relation) grid axis over the adjacency.
    return tm


@functools.partial(jax.jit, static_argnames=("row_tile",))
def gcn_multirelation_forward(x, adjs, w1, b1, w2, b2, *, row_tile=None):
    """x: (N, Fin), adjs: (A, N, N), w1: (A, Fin, H), b1: (H,), w2: (A, H, H),
    b2: (H,)  ->  (N, H) in x.dtype."""
    N, Fin = x.shape
    A, _, H = w1.shape
    out_dtype = x.dtype

    # Lane-dense padding of the *feature* axes only (H -> h_p makes the output
    # stores unmasked full vregs); the adjacency is never padded/transposed.
    fin_p = _round_up(Fin, 128)
    h_p = _round_up(H, 128)

    # f32 end to end: a bf16 cast of the row-normalised adjacency would cost an
    # extra full HBM pass in the wrapper and lose mantissa, and the kernel is
    # HBM-bound so f32 MXU passes are not the limiter.  Accumulation is f32.
    # TODO(synk): optionally cast x / W (and supp) to bf16 in-kernel for
    # compute-bound shapes.
    x_p = jnp.pad(x.astype(jnp.float32), ((0, 0), (0, fin_p - Fin)))
    w1_cat = _concat_weights(w1, fin_p, h_p)      # (fin_p, A*h_p)
    w2_cat = _concat_weights(w2, h_p, h_p)        # (h_p,  A*h_p)
    b1_v = jnp.pad(b1.astype(jnp.float32), (0, h_p - H)).reshape(1, h_p)
    b2_v = jnp.pad(b2.astype(jnp.float32), (0, h_p - H)).reshape(1, h_p)
    adjs_f = adjs.astype(jnp.float32)

    budget = _vmem_budget_bytes()            # 64 MiB (v7x) / 128 MiB (v5e,v6e)
    vmem_limit = int(0.8 * budget)           # raise past v5e's 16 MiB default

    # Rough VMEM estimate of the fused single-block path: double-buffered
    # adjacency + x/out blocks + live supp/x1 values + weights (with headroom).
    fused_bytes = (2 * A * N * N + 2 * N * (fin_p + h_p)
                   + N * (2 * A * h_p + 2 * h_p)
                   + 2 * (fin_p + h_p) * A * h_p) * 4

    if row_tile is None and fused_bytes <= int(0.7 * vmem_limit):
        out = _run_fused(x_p, w1_cat, b1_v, w2_cat, b2_v, adjs_f,
                         out_dtype, vmem_limit)
    else:
        tm = _pick_row_tile(A, N, fin_p, h_p, vmem_limit) if row_tile is None \
            else int(row_tile)
        tm = _round_up(min(tm, _round_up(N, 8)), 8)
        x1 = _run_layer_tiled(x_p, w1_cat, b1_v, adjs_f, tm,
                              jnp.float32, vmem_limit)
        out = _run_layer_tiled(x1, w2_cat, b2_v, adjs_f, tm,
                               out_dtype, vmem_limit)
    return out[:, :H]


# --------------------------------------------------------------------------
# Module-like wrapper + reference
# --------------------------------------------------------------------------
class GCNMultirelationPallas:
    """JAX/Pallas port of GCN_multirelation (skip_mode='none',
    attention_mode='none', eval mode so dropout is identity)."""

    def __init__(self, num_relation, num_entities, num_adjs, nfeat, nhid,
                 dropout, key):
        del num_relation, num_entities  # only used by attention modes
        self.num_adjs = num_adjs
        self.dropout = dropout          # eval mode -> unused
        k1, k2, k3, k4 = jax.random.split(key, 4)
        s = 1.0 / jnp.sqrt(nhid)
        self.w1 = jax.random.uniform(k1, (num_adjs, nfeat, nhid),
                                     jnp.float32, -s, s)
        self.b1 = jax.random.uniform(k2, (nhid,), jnp.float32, -s, s)
        self.w2 = jax.random.uniform(k3, (num_adjs, nhid, nhid),
                                     jnp.float32, -s, s)
        self.b2 = jax.random.uniform(k4, (nhid,), jnp.float32, -s, s)
        self.out_dim = nhid

    def __call__(self, x, adjs, row_tile=None):
        # x2 = relu(gc2(relu(gc1(x, adjs)), adjs)); skip_mode == 'none'
        return gcn_multirelation_forward(x, adjs, self.w1, self.b1,
                                         self.w2, self.b2, row_tile=row_tile)


def _reference(x, adjs, w1, b1, w2, b2):
    """Pure-f32 reference of the stated GraphConvolution semantics."""
    def layer(h, w, b):
        acc = jnp.zeros((h.shape[0], w.shape[-1]), jnp.float32)
        for a in range(w.shape[0]):
            acc = acc + adjs[a] @ (h @ w[a])
        return jnp.maximum(acc + b[None, :], 0.0)
    return layer(layer(x, w1, b1), w2, b2)


if __name__ == "__main__":
    num_relation = 3
    num_entities = 64
    num_adjs = 2
    nfeat = 32
    nhid = 32
    dropout = 0.5  # eval mode -> identity

    key = jax.random.PRNGKey(0)
    kx, ka, kp = jax.random.split(key, 3)

    x = jax.random.normal(kx, (num_entities, nfeat), jnp.float32)
    adjs = jax.random.uniform(ka, (num_adjs, num_entities, num_entities),
                              jnp.float32)
    adjs = adjs / jnp.sum(adjs, axis=-1, keepdims=True)  # row-normalised

    model = GCNMultirelationPallas(num_relation, num_entities, num_adjs,
                                   nfeat, nhid, dropout, kp)
    ref = _reference(x, adjs, model.w1, model.b1, model.w2, model.b2)

    # 1) small-graph fused path (both layers in one pallas_call, grid=(1,))
    out = jax.block_until_ready(model(x, adjs))
    assert out.shape == (num_entities, nhid)
    assert jnp.allclose(out, ref, atol=3e-2, rtol=3e-2), \
        float(jnp.max(jnp.abs(out - ref)))

    # 2) row-tiled / pipelined path (forced small tile so the grid loop and
    #    "parallel" row axis are actually exercised)
    out_t = jax.block_until_ready(model(x, adjs, row_tile=32))
    assert out_t.shape == (num_entities, nhid)
    assert jnp.allclose(out_t, ref, atol=3e-2, rtol=3e-2), \
        float(jnp.max(jnp.abs(out_t - ref)))

    print("KERNEL_OK")
</pallas_src>

<mosaic_0001>
module attributes {stable_mosaic.version = 11 : i64} {
  func.func @_fused_gcn_kernel(%arg0: i32, %arg1: memref<64x128xf32, #tpu.memory_space<vmem>>, %arg2: memref<128x256xf32, #tpu.memory_space<vmem>>, %arg3: memref<1x128xf32, #tpu.memory_space<vmem>>, %arg4: memref<128x256xf32, #tpu.memory_space<vmem>>, %arg5: memref<1x128xf32, #tpu.memory_space<vmem>>, %arg6: memref<2x64x64xf32, #tpu.memory_space<vmem>>, %arg7: memref<64x128xf32, #tpu.memory_space<vmem>>) attributes {dimension_semantics = [#tpu.dimension_semantics<arbitrary>], iteration_bounds = array<i64: 1>, scalar_prefetch = 0 : i64, scratch_operands = 0 : i64, tpu.core_type = #tpu.core_type<tc>, window_params = [{pipeline_mode = #tpu.pipeline_mode<synchronous>, transform_indices = @transform_0, window_bounds = array<i64: 64, 128>}, {pipeline_mode = #tpu.pipeline_mode<synchronous>, transform_indices = @transform_1, window_bounds = array<i64: 128, 256>}, {pipeline_mode = #tpu.pipeline_mode<synchronous>, transform_indices = @transform_2, window_bounds = array<i64: 1, 128>}, {pipeline_mode = #tpu.pipeline_mode<synchronous>, transform_indices = @transform_3, window_bounds = array<i64: 128, 256>}, {pipeline_mode = #tpu.pipeline_mode<synchronous>, transform_indices = @transform_4, window_bounds = array<i64: 1, 128>}, {pipeline_mode = #tpu.pipeline_mode<synchronous>, transform_indices = @transform_5, window_bounds = array<i64: 2, 64, 64>}, {pipeline_mode = #tpu.pipeline_mode<synchronous>, transform_indices = @transform_6, window_bounds = array<i64: 64, 128>}]} {
    %c0 = arith.constant 0 : index
    %c0_0 = arith.constant 0 : index
    %0 = vector.load %arg1[%c0, %c0_0] : memref<64x128xf32, #tpu.memory_space<vmem>>, vector<64x128xf32>
    %c0_1 = arith.constant 0 : index
    %c0_2 = arith.constant 0 : index
    %1 = vector.load %arg2[%c0_1, %c0_2] : memref<128x256xf32, #tpu.memory_space<vmem>>, vector<128x256xf32>
    %c0_3 = arith.constant 0 : index
    %c0_4 = arith.constant 0 : index
    %2 = vector.load %arg3[%c0_3, %c0_4] : memref<1x128xf32, #tpu.memory_space<vmem>>, vector<1x128xf32>
    %cst = arith.constant dense<0.000000e+00> : vector<64x256xf32>
    %3 = tpu.matmul %0, %1, %cst {dimension_numbers = #tpu.dot_dimension_numbers<[1], [0], [0], [1], [0, 0, 1, 1], [], []>} : vector<64x128xf32>, vector<128x256xf32>, vector<64x256xf32> -> vector<64x256xf32>
    %c0_5 = arith.constant 0 : index
    %c0_6 = arith.constant 0 : index
    %c0_7 = arith.constant 0 : index
    %4 = vector.load %arg6[%c0_5, %c0_6, %c0_7] : memref<2x64x64xf32, #tpu.memory_space<vmem>>, vector<1x64x64xf32>
    %5 = vector.shape_cast %4 : vector<1x64x64xf32> to vector<64x64xf32>
    %6 = vector.extract_strided_slice %3 {offsets = [0, 0], sizes = [64, 128], strides = [1, 1]} : vector<64x256xf32> to vector<64x128xf32>
    %cst_8 = arith.constant dense<0.000000e+00> : vector<64x128xf32>
    %7 = tpu.matmul %5, %6, %cst_8 {dimension_numbers = #tpu.dot_dimension_numbers<[1], [0], [0], [1], [0, 0, 1, 1], [], []>} : vector<64x64xf32>, vector<64x128xf32>, vector<64x128xf32> -> vector<64x128xf32>
    %c1 = arith.constant 1 : index
    %c0_9 = arith.constant 0 : index
    %c0_10 = arith.constant 0 : index
    %8 = vector.load %arg6[%c1, %c0_9, %c0_10] : memref<2x64x64xf32, #tpu.memory_space<vmem>>, vector<1x64x64xf32>
    %9 = vector.shape_cast %8 : vector<1x64x64xf32> to vector<64x64xf32>
    %10 = vector.extract_strided_slice %3 {offsets = [0, 128], sizes = [64, 128], strides = [1, 1]} : vector<64x256xf32> to vector<64x128xf32>
    %cst_11 = arith.constant dense<0.000000e+00> : vector<64x128xf32>
    %11 = tpu.matmul %9, %10, %cst_11 {dimension_numbers = #tpu.dot_dimension_numbers<[1], [0], [0], [1], [0, 0, 1, 1], [], []>} : vector<64x64xf32>, vector<64x128xf32>, vector<64x128xf32> -> vector<64x128xf32>
    %12 = arith.addf %7, %11 : vector<64x128xf32>
    %13 = vector.broadcast %2 : vector<1x128xf32> to vector<64x128xf32>
    %14 = arith.addf %12, %13 : vector<64x128xf32>
    %cst_12 = arith.constant 0.000000e+00 : f32
    %15 = vector.broadcast %cst_12 : f32 to vector<64x128xf32>
    %16 = arith.maximumf %14, %15 : vector<64x128xf32>
    %c0_13 = arith.constant 0 : index
    %c0_14 = arith.constant 0 : index
    %17 = vector.load %arg4[%c0_13, %c0_14] : memref<128x256xf32, #tpu.memory_space<vmem>>, vector<128x256xf32>
    %c0_15 = arith.constant 0 : index
    %c0_16 = arith.constant 0 : index
    %18 = vector.load %arg5[%c0_15, %c0_16] : memref<1x128xf32, #tpu.memory_space<vmem>>, vector<1x128xf32>
    %cst_17 = arith.constant dense<0.000000e+00> : vector<64x256xf32>
    %19 = tpu.matmul %16, %17, %cst_17 {dimension_numbers = #tpu.dot_dimension_numbers<[1], [0], [0], [1], [0, 0, 1, 1], [], []>} : vector<64x128xf32>, vector<128x256xf32>, vector<64x256xf32> -> vector<64x256xf32>
    %c0_18 = arith.constant 0 : index
    %c0_19 = arith.constant 0 : index
    %c0_20 = arith.constant 0 : index
    %20 = vector.load %arg6[%c0_18, %c0_19, %c0_20] : memref<2x64x64xf32, #tpu.memory_space<vmem>>, vector<1x64x64xf32>
    %21 = vector.shape_cast %20 : vector<1x64x64xf32> to vector<64x64xf32>
    %22 = vector.extract_strided_slice %19 {offsets = [0, 0], sizes = [64, 128], strides = [1, 1]} : vector<64x256xf32> to vector<64x128xf32>
    %cst_21 = arith.constant dense<0.000000e+00> : vector<64x128xf32>
    %23 = tpu.matmul %21, %22, %cst_21 {dimension_numbers = #tpu.dot_dimension_numbers<[1], [0], [0], [1], [0, 0, 1, 1], [], []>} : vector<64x64xf32>, vector<64x128xf32>, vector<64x128xf32> -> vector<64x128xf32>
    %c1_22 = arith.constant 1 : index
    %c0_23 = arith.constant 0 : index
    %c0_24 = arith.constant 0 : index
    %24 = vector.load %arg6[%c1_22, %c0_23, %c0_24] : memref<2x64x64xf32, #tpu.memory_space<vmem>>, vector<1x64x64xf32>
    %25 = vector.shape_cast %24 : vector<1x64x64xf32> to vector<64x64xf32>
    %26 = vector.extract_strided_slice %19 {offsets = [0, 128], sizes = [64, 128], strides = [1, 1]} : vector<64x256xf32> to vector<64x128xf32>
    %cst_25 = arith.constant dense<0.000000e+00> : vector<64x128xf32>
    %27 = tpu.matmul %25, %26, %cst_25 {dimension_numbers = #tpu.dot_dimension_numbers<[1], [0], [0], [1], [0, 0, 1, 1], [], []>} : vector<64x64xf32>, vector<64x128xf32>, vector<64x128xf32> -> vector<64x128xf32>
    %28 = arith.addf %23, %27 : vector<64x128xf32>
    %29 = vector.broadcast %18 : vector<1x128xf32> to vector<64x128xf32>
    %30 = arith.addf %28, %29 : vector<64x128xf32>
    %cst_26 = arith.constant 0.000000e+00 : f32
    %31 = vector.broadcast %cst_26 : f32 to vector<64x128xf32>
    %32 = arith.maximumf %30, %31 : vector<64x128xf32>
    %c0_27 = arith.constant 0 : index
    %c0_28 = arith.constant 0 : index
    %33 = vector.load %arg7[%c0_27, %c0_28] : memref<64x128xf32, #tpu.memory_space<vmem>>, vector<64x128xf32>
    tpu.vector_store %arg7[%c0_27, %c0_28], %32 {strides = array<i32>} : memref<64x128xf32, #tpu.memory_space<vmem>>, vector<64x128xf32>,
    return
  }
  func.func @transform_0(%arg0: i32) -> (i32, i32) {
    %c0_i32 = arith.constant 0 : i32
    %c0_i32_0 = arith.constant 0 : i32
    %c0_i32_1 = arith.constant 0 : i32
    return %c0_i32, %c0_i32_0 : i32, i32
  }
  func.func @transform_1(%arg0: i32) -> (i32, i32) {
    %c0_i32 = arith.constant 0 : i32
    %c0_i32_0 = arith.constant 0 : i32
    %c0_i32_1 = arith.constant 0 : i32
    return %c0_i32, %c0_i32_0 : i32, i32
  }
  func.func @transform_2(%arg0: i32) -> (i32, i32) {
    %c0_i32 = arith.constant 0 : i32
    %c0_i32_0 = arith.constant 0 : i32
    %c0_i32_1 = arith.constant 0 : i32
    return %c0_i32, %c0_i32_0 : i32, i32
  }
  func.func @transform_3(%arg0: i32) -> (i32, i32) {
    %c0_i32 = arith.constant 0 : i32
    %c0_i32_0 = arith.constant 0 : i32
    %c0_i32_1 = arith.constant 0 : i32
    return %c0_i32, %c0_i32_0 : i32, i32
  }
  func.func @transform_4(%arg0: i32) -> (i32, i32) {
    %c0_i32 = arith.constant 0 : i32
    %c0_i32_0 = arith.constant 0 : i32
    %c0_i32_1 = arith.constant 0 : i32
    return %c0_i32, %c0_i32_0 : i32, i32
  }
  func.func @transform_5(%arg0: i32) -> (i32, i32, i32) {
    %c0_i32 = arith.constant 0 : i32
    %c0_i32_0 = arith.constant 0 : i32
    %c0_i32_1 = arith.constant 0 : i32
    %c0_i32_2 = arith.constant 0 : i32
    return %c0_i32, %c0_i32_0, %c0_i32_1 : i32, i32, i32
  }
  func.func @transform_6(%arg0: i32) -> (i32, i32) {
    %c0_i32 = arith.constant 0 : i32
    %c0_i32_0 = arith.constant 0 : i32
    %c0_i32_1 = arith.constant 0 : i32
    return %c0_i32, %c0_i32_0 : i32, i32
  }
}

</mosaic_0001>

<llo_original>
// kernel: gcn_multirelation_forward.1
$region0: #{gcn_multirelation_forward.1}
  #allocation0 [shape = 'u32[]', space=smem, size = 0x4, offset = 0x4, fixed_abs, tag = 'smem constant byte address 0x4 - core index']
  #allocation1 [shape = 'u32[72,128]{1,0:T(1,128)}', space=vmem, size = 0x9000, scoped, tag = 'internal scratch']
  %s0 = inlined_call_operand.vmem [shape: f32[64,128], index: 0, kind: input, shape index: {}]
  %s1 = inlined_call_operand.vmem [shape: f32[128,256], index: 1, kind: input, shape index: {}]
  %s2 = inlined_call_operand.vmem [shape: f32[1,128], index: 2, kind: input, shape index: {}]
  %s3 = inlined_call_operand.vmem [shape: f32[128,256], index: 3, kind: input, shape index: {}]
  %s4 = inlined_call_operand.vmem [shape: f32[1,128], index: 4, kind: input, shape index: {}]
  %s5 = inlined_call_operand.vmem [shape: f32[2,64,64], index: 5, kind: input, shape index: {}]
  %s6 = inlined_call_operand.vmem [shape: f32[64,128], index: 6, kind: output, shape index: {}]
  %s7 = sld [smem:[#allocation0]]
  $region34: #{gcn_multirelation_forward.1} parent=0
    _
  %s9 = ssub.s32 1, %s7
  %s10 = scalar_select 0, %s9, %s7
  // Predicated region
  $region2: #{gcn_multirelation_forward.1} parent=0 // pred_check
    _
  $region3: #{gcn_multirelation_forward.1} parent=0 // pred_check_branch
    %12 = sbr.rel (0) target = $region5
  $region4: #{gcn_multirelation_forward.1} parent=0 // pred_region
    _
  $region5: #{gcn_multirelation_forward.1} parent=0 // pred_fallthru
    _
  // Predicated region
  $region6: #{gcn_multirelation_forward.1} parent=0 // pred_check
    _
  $region7: #{gcn_multirelation_forward.1} parent=0 // pred_check_branch
    %14 = sbr.rel (0) target = $region9
  $region8: #{gcn_multirelation_forward.1} parent=0 // pred_region
    _
  $region9: #{gcn_multirelation_forward.1} parent=0 // pred_fallthru
    _
  // Predicated region
  $region10: #{gcn_multirelation_forward.1} parent=0 // pred_check
    _
  $region11: #{gcn_multirelation_forward.1} parent=0 // pred_check_branch
    %16 = sbr.rel (0) target = $region13
  $region12: #{gcn_multirelation_forward.1} parent=0 // pred_region
    _
  $region13: #{gcn_multirelation_forward.1} parent=0 // pred_fallthru
    _
  // Predicated region
  $region14: #{gcn_multirelation_forward.1} parent=0 // pred_check
    _
  $region15: #{gcn_multirelation_forward.1} parent=0 // pred_check_branch
    %18 = sbr.rel (0) target = $region17
  $region16: #{gcn_multirelation_forward.1} parent=0 // pred_region
    _
  $region17: #{gcn_multirelation_forward.1} parent=0 // pred_fallthru
    _
  // Predicated region
  $region18: #{gcn_multirelation_forward.1} parent=0 // pred_check
    _
  $region19: #{gcn_multirelation_forward.1} parent=0 // pred_check_branch
    %20 = sbr.rel (0) target = $region21
  $region20: #{gcn_multirelation_forward.1} parent=0 // pred_region
    _
  $region21: #{gcn_multirelation_forward.1} parent=0 // pred_fallthru
    _
  // Predicated region
  $region22: #{gcn_multirelation_forward.1} parent=0 // pred_check
    _
  $region23: #{gcn_multirelation_forward.1} parent=0 // pred_check_branch
    %22 = sbr.rel (0) target = $region25
  $region24: #{gcn_multirelation_forward.1} parent=0 // pred_region
    _
  $region25: #{gcn_multirelation_forward.1} parent=0 // pred_fallthru
    _
  %v23 = vld [vmem:[%s0] sm:$0xff]
  %v24 = vld [vmem:[%s0 + $0x8] sm:$0xff]
  %v25 = vld [vmem:[%s0 + $0x10] sm:$0xff]
  %v26 = vld [vmem:[%s0 + $0x18] sm:$0xff]
  %v27 = vld [vmem:[%s0 + $0x20] sm:$0xff]
  %v28 = vld [vmem:[%s0 + $0x28] sm:$0xff]
  %v29 = vld [vmem:[%s0 + $0x30] sm:$0xff]
  %v30 = vld [vmem:[%s0 + $0x38] sm:$0xff]
  %v31 = vld [vmem:[%s1] sm:$0xff]
  %v32 = vld [vmem:[%s1 + $0x8] sm:$0xff]
  %v33 = vld [vmem:[%s1 + $0x10] sm:$0xff]
  %v34 = vld [vmem:[%s1 + $0x18] sm:$0xff]
  %v35 = vld [vmem:[%s1 + $0x20] sm:$0xff]
  %v36 = vld [vmem:[%s1 + $0x28] sm:$0xff]
  %v37 = vld [vmem:[%s1 + $0x30] sm:$0xff]
  %v38 = vld [vmem:[%s1 + $0x38] sm:$0xff]
  %v39 = vld [vmem:[%s1 + $0x40] sm:$0xff]
  %v40 = vld [vmem:[%s1 + $0x48] sm:$0xff]
  %v41 = vld [vmem:[%s1 + $0x50] sm:$0xff]
  %v42 = vld [vmem:[%s1 + $0x58] sm:$0xff]
  %v43 = vld [vmem:[%s1 + $0x60] sm:$0xff]
  %v44 = vld [vmem:[%s1 + $0x68] sm:$0xff]
  %v45 = vld [vmem:[%s1 + $0x70] sm:$0xff]
  %v46 = vld [vmem:[%s1 + $0x78] sm:$0xff]
  %v47 = vld [vmem:[%s1 + $0x80] sm:$0xff]
  %v48 = vld [vmem:[%s1 + $0x88] sm:$0xff]
  %v49 = vld [vmem:[%s1 + $0x90] sm:$0xff]
  %v50 = vld [vmem:[%s1 + $0x98] sm:$0xff]
  %v51 = vld [vmem:[%s1 + $0xa0] sm:$0xff]
  %v52 = vld [vmem:[%s1 + $0xa8] sm:$0xff]
  %v53 = vld [vmem:[%s1 + $0xb0] sm:$0xff]
  %v54 = vld [vmem:[%s1 + $0xb8] sm:$0xff]
  %v55 = vld [vmem:[%s1 + $0xc0] sm:$0xff]
  %v56 = vld [vmem:[%s1 + $0xc8] sm:$0xff]
  %v57 = vld [vmem:[%s1 + $0xd0] sm:$0xff]
  %v58 = vld [vmem:[%s1 + $0xd8] sm:$0xff]
  %v59 = vld [vmem:[%s1 + $0xe0] sm:$0xff]
  %v60 = vld [vmem:[%s1 + $0xe8] sm:$0xff]
  %v61 = vld [vmem:[%s1 + $0xf0] sm:$0xff]
  %v62 = vld [vmem:[%s1 + $0xf8] sm:$0xff]
  %v63 = vld [vmem:[%s2] sm:$0x1]
  %64 = vmatpush.msra.mxu0 %v61
  %65 = vmatpush.msra.mxu0 %v59
  %66 = vmatpush.msra.mxu0 %v57
  %67 = vmatpush.msra.mxu0 %v55
  %68 = vmatpush.msra.mxu0 %v53
  %69 = vmatpush.msra.mxu0 %v51
  %70 = vmatpush.msra.mxu0 %v49
  %71 = vmatpush.msra.mxu0 %v47
  %72 = vmatpush.msra.mxu0 %v45
  %73 = vmatpush.msra.mxu0 %v43
  %74 = vmatpush.msra.mxu0 %v41
  %75 = vmatpush.msra.mxu0 %v39
  %76 = vmatpush.msra.mxu0 %v37
  %77 = vmatpush.msra.mxu0 %v35
  %78 = vmatpush.msra.mxu0 %v33
  %79 = vmatpush.msra.mxu0 %v31
  %80 = vmatmul.f32.gmra.mxu0 %v23
  %v81 = vpop.f32.mrf.mxu0
  %v82 = vadd.f32 0.0, %v81
  %83 = vmatmul.f32.gmra.mxu0 %v24
  %v84 = vpop.f32.mrf.mxu0
  %v85 = vadd.f32 0.0, %v84
  %86 = vmatmul.f32.gmra.mxu0 %v25
  %v87 = vpop.f32.mrf.mxu0
  %v88 = vadd.f32 0.0, %v87
  %89 = vmatmul.f32.gmra.mxu0 %v26
  %v90 = vpop.f32.mrf.mxu0
  %v91 = vadd.f32 0.0, %v90
  %92 = vmatmul.f32.gmra.mxu0 %v27
  %v93 = vpop.f32.mrf.mxu0
  %v94 = vadd.f32 0.0, %v93
  %95 = vmatmul.f32.gmra.mxu0 %v28
  %v96 = vpop.f32.mrf.mxu0
  %v97 = vadd.f32 0.0, %v96
  %98 = vmatmul.f32.gmra.mxu0 %v29
  %v99 = vpop.f32.mrf.mxu0
  %v100 = vadd.f32 0.0, %v99
  %101 = vmatmul.f32.gmra.mxu0 %v30
  %v102 = vpop.f32.mrf.mxu0
  %v103 = vadd.f32 0.0, %v102
  %104 = vdwg.mxu0
  %105 = vmatpush.msra.mxu0 %v62
  %106 = vmatpush.msra.mxu0 %v60
  %107 = vmatpush.msra.mxu0 %v58
  %108 = vmatpush.msra.mxu0 %v56
  %109 = vmatpush.msra.mxu0 %v54
  %110 = vmatpush.msra.mxu0 %v52
  %111 = vmatpush.msra.mxu0 %v50
  %112 = vmatpush.msra.mxu0 %v48
  %113 = vmatpush.msra.mxu0 %v46
  %114 = vmatpush.msra.mxu0 %v44
  %115 = vmatpush.msra.mxu0 %v42
  %116 = vmatpush.msra.mxu0 %v40
  %117 = vmatpush.msra.mxu0 %v38
  %118 = vmatpush.msra.mxu0 %v36
  %119 = vmatpush.msra.mxu0 %v34
  %120 = vmatpush.msra.mxu0 %v32
  %121 = vmatmul.f32.gmra.mxu0 %v23
  %v122 = vpop.f32.mrf.mxu0
  %v123 = vadd.f32 0.0, %v122
  %124 = vmatmul.f32.gmra.mxu0 %v24
  %v125 = vpop.f32.mrf.mxu0
  %v126 = vadd.f32 0.0, %v125
  %127 = vmatmul.f32.gmra.mxu0 %v25
  %v128 = vpop.f32.mrf.mxu0
  %v129 = vadd.f32 0.0, %v128
  %130 = vmatmul.f32.gmra.mxu0 %v26
  %v131 = vpop.f32.mrf.mxu0
  %v132 = vadd.f32 0.0, %v131
  %133 = vmatmul.f32.gmra.mxu0 %v27
  %v134 = vpop.f32.mrf.mxu0
  %v135 = vadd.f32 0.0, %v134
  %136 = vmatmul.f32.gmra.mxu0 %v28
  %v137 = vpop.f32.mrf.mxu0
  %v138 = vadd.f32 0.0, %v137
  %139 = vmatmul.f32.gmra.mxu0 %v29
  %v140 = vpop.f32.mrf.mxu0
  %v141 = vadd.f32 0.0, %v140
  %142 = vmatmul.f32.gmra.mxu0 %v30
  %v143 = vpop.f32.mrf.mxu0
  %v144 = vadd.f32 0.0, %v143
  %145 = vdwg.mxu0
  %v146 = vld [vmem:[%s5] sm:$0xff]
  %v147 = vld [vmem:[%s5 + $0x8] sm:$0xff]
  %v148 = vld [vmem:[%s5 + $0x10] sm:$0xff]
  %v149 = vld [vmem:[%s5 + $0x18] sm:$0xff]
  %v150 = vld [vmem:[%s5 + $0x20] sm:$0xff]
  %v151 = vld [vmem:[%s5 + $0x28] sm:$0xff]
  %v152 = vld [vmem:[%s5 + $0x30] sm:$0xff]
  %v153 = vld [vmem:[%s5 + $0x38] sm:$0xff]
  %s154 = scalar_lea.vmem %s5, 64
  %v155 = vld [vmem:[%s154] sm:$0xff]
  %v156 = vld [vmem:[%s154 + $0x8] sm:$0xff]
  %v157 = vld [vmem:[%s154 + $0x10] sm:$0xff]
  %v158 = vld [vmem:[%s154 + $0x18] sm:$0xff]
  %v159 = vld [vmem:[%s154 + $0x20] sm:$0xff]
  %v160 = vld [vmem:[%s154 + $0x28] sm:$0xff]
  %v161 = vld [vmem:[%s154 + $0x30] sm:$0xff]
  %v162 = vld [vmem:[%s154 + $0x38] sm:$0xff]
  %vm163 = vcmask 523264
  %v165 = vsel %vm163, %v155, 0
  %v168 = vsel %vm163, %v156, 0
  %v171 = vsel %vm163, %v157, 0
  %v174 = vsel %vm163, %v158, 0
  %v177 = vsel %vm163, %v159, 0
  %v180 = vsel %vm163, %v160, 0
  %v183 = vsel %vm163, %v161, 0
  %v186 = vsel %vm163, %v162, 0
  %188 = vmatpush.msra.mxu0 0.0
  %189 = vmatpush.msra.mxu0 0.0
  %190 = vmatpush.msra.mxu0 0.0
  %191 = vmatpush.msra.mxu0 0.0
  %192 = vmatpush.msra.mxu0 0.0
  %193 = vmatpush.msra.mxu0 0.0
  %194 = vmatpush.msra.mxu0 0.0
  %195 = vmatpush.msra.mxu0 0.0
  %196 = vmatpush.msra.mxu0 %v144
  %197 = vmatpush.msra.mxu0 %v141
  %198 = vmatpush.msra.mxu0 %v138
  %199 = vmatpush.msra.mxu0 %v135
  %200 = vmatpush.msra.mxu0 %v132
  %201 = vmatpush.msra.mxu0 %v129
  %202 = vmatpush.msra.mxu0 %v126
  %203 = vmatpush.msra.mxu0 %v123
  %204 = vmatmul.f32.gmra.mxu0 %v165
  %v205 = vpop.f32.mrf.mxu0
  %v206 = vadd.f32 0.0, %v205
  %207 = vmatmul.f32.gmra.mxu0 %v168
  %v208 = vpop.f32.mrf.mxu0
  %v209 = vadd.f32 0.0, %v208
  %210 = vmatmul.f32.gmra.mxu0 %v171
  %v211 = vpop.f32.mrf.mxu0
  %v212 = vadd.f32 0.0, %v211
  %213 = vmatmul.f32.gmra.mxu0 %v174
  %v214 = vpop.f32.mrf.mxu0
  %v215 = vadd.f32 0.0, %v214
  %216 = vmatmul.f32.gmra.mxu0 %v177
  %v217 = vpop.f32.mrf.mxu0
  %v218 = vadd.f32 0.0, %v217
  %219 = vmatmul.f32.gmra.mxu0 %v180
  %v220 = vpop.f32.mrf.mxu0
  %v221 = vadd.f32 0.0, %v220
  %222 = vmatmul.f32.gmra.mxu0 %v183
  %v223 = vpop.f32.mrf.mxu0
  %v224 = vadd.f32 0.0, %v223
  %225 = vmatmul.f32.gmra.mxu0 %v186
  %v226 = vpop.f32.mrf.mxu0
  %v227 = vadd.f32 0.0, %v226
  %228 = vdwg.mxu0
  %v230 = vsel %vm163, %v146, 0
  %v233 = vsel %vm163, %v147, 0
  %v236 = vsel %vm163, %v148, 0
  %v239 = vsel %vm163, %v149, 0
  %v242 = vsel %vm163, %v150, 0
  %v245 = vsel %vm163, %v151, 0
  %v248 = vsel %vm163, %v152, 0
  %v251 = vsel %vm163, %v153, 0
  %253 = vmatpush.msra.mxu0 0.0
  %254 = vmatpush.msra.mxu0 0.0
  %255 = vmatpush.msra.mxu0 0.0
  %256 = vmatpush.msra.mxu0 0.0
  %257 = vmatpush.msra.mxu0 0.0
  %258 = vmatpush.msra.mxu0 0.0
  %259 = vmatpush.msra.mxu0 0.0
  %260 = vmatpush.msra.mxu0 0.0
  %261 = vmatpush.msra.mxu0 %v103
  %262 = vmatpush.msra.mxu0 %v100
  %263 = vmatpush.msra.mxu0 %v97
  %264 = vmatpush.msra.mxu0 %v94
  %265 = vmatpush.msra.mxu0 %v91
  %266 = vmatpush.msra.mxu0 %v88
  %267 = vmatpush.msra.mxu0 %v85
  %268 = vmatpush.msra.mxu0 %v82
  %269 = vmatmul.f32.gmra.mxu0 %v230
  %v270 = vpop.f32.mrf.mxu0
  %v271 = vadd.f32 %v206, %v270
  %272 = vmatmul.f32.gmra.mxu0 %v233
  %v273 = vpop.f32.mrf.mxu0
  %v274 = vadd.f32 %v209, %v273
  %275 = vmatmul.f32.gmra.mxu0 %v236
  %v276 = vpop.f32.mrf.mxu0
  %v277 = vadd.f32 %v212, %v276
  %278 = vmatmul.f32.gmra.mxu0 %v239
  %v279 = vpop.f32.mrf.mxu0
  %v280 = vadd.f32 %v215, %v279
  %281 = vmatmul.f32.gmra.mxu0 %v242
  %v282 = vpop.f32.mrf.mxu0
  %v283 = vadd.f32 %v218, %v282
  %284 = vmatmul.f32.gmra.mxu0 %v245
  %v285 = vpop.f32.mrf.mxu0
  %v286 = vadd.f32 %v221, %v285
  %287 = vmatmul.f32.gmra.mxu0 %v248
  %v288 = vpop.f32.mrf.mxu0
  %v289 = vadd.f32 %v224, %v288
  %290 = vmatmul.f32.gmra.mxu0 %v251
  %v291 = vpop.f32.mrf.mxu0
  %v292 = vadd.f32 %v227, %v291
  %293 = vdwg.mxu0
  %v295 = vperm.slane %v63, 0
  %v297 = vadd.f32 %v271, %v295
  %v298 = vadd.f32 %v274, %v295
  %v299 = vadd.f32 %v277, %v295
  %v300 = vadd.f32 %v280, %v295
  %v301 = vadd.f32 %v283, %v295
  %v302 = vadd.f32 %v286, %v295
  %v303 = vadd.f32 %v289, %v295
  %v304 = vadd.f32 %v292, %v295
  %v305 = vmax.f32 %v297, 0.0
  %v306 = vmax.f32 %v298, 0.0
  %v307 = vmax.f32 %v299, 0.0
  %v308 = vmax.f32 %v300, 0.0
  %v309 = vmax.f32 %v301, 0.0
  %v310 = vmax.f32 %v302, 0.0
  %v311 = vmax.f32 %v303, 0.0
  %v312 = vmax.f32 %v304, 0.0
  %v313 = vld [vmem:[%s3] sm:$0xff]
  %v314 = vld [vmem:[%s3 + $0x8] sm:$0xff]
  %v315 = vld [vmem:[%s3 + $0x10] sm:$0xff]
  %v316 = vld [vmem:[%s3 + $0x18] sm:$0xff]
  %v317 = vld [vmem:[%s3 + $0x20] sm:$0xff]
  %v318 = vld [vmem:[%s3 + $0x28] sm:$0xff]
  %v319 = vld [vmem:[%s3 + $0x30] sm:$0xff]
  %v320 = vld [vmem:[%s3 + $0x38] sm:$0xff]
  %v321 = vld [vmem:[%s3 + $0x40] sm:$0xff]
  %v322 = vld [vmem:[%s3 + $0x48] sm:$0xff]
  %v323 = vld [vmem:[%s3 + $0x50] sm:$0xff]
  %v324 = vld [vmem:[%s3 + $0x58] sm:$0xff]
  %v325 = vld [vmem:[%s3 + $0x60] sm:$0xff]
  %v326 = vld [vmem:[%s3 + $0x68] sm:$0xff]
  %v327 = vld [vmem:[%s3 + $0x70] sm:$0xff]
  %v328 = vld [vmem:[%s3 + $0x78] sm:$0xff]
  %v329 = vld [vmem:[%s3 + $0x80] sm:$0xff]
  %v330 = vld [vmem:[%s3 + $0x88] sm:$0xff]
  %v331 = vld [vmem:[%s3 + $0x90] sm:$0xff]
  %v332 = vld [vmem:[%s3 + $0x98] sm:$0xff]
  %v333 = vld [vmem:[%s3 + $0xa0] sm:$0xff]
  %v334 = vld [vmem:[%s3 + $0xa8] sm:$0xff]
  %v335 = vld [vmem:[%s3 + $0xb0] sm:$0xff]
  %v336 = vld [vmem:[%s3 + $0xb8] sm:$0xff]
  %v337 = vld [vmem:[%s3 + $0xc0] sm:$0xff]
  %v338 = vld [vmem:[%s3 + $0xc8] sm:$0xff]
  %v339 = vld [vmem:[%s3 + $0xd0] sm:$0xff]
  %v340 = vld [vmem:[%s3 + $0xd8] sm:$0xff]
  %v341 = vld [vmem:[%s3 + $0xe0] sm:$0xff]
  %v342 = vld [vmem:[%s3 + $0xe8] sm:$0xff]
  %v343 = vld [vmem:[%s3 + $0xf0] sm:$0xff]
  %v344 = vld [vmem:[%s3 + $0xf8] sm:$0xff]
  %v345 = vld [vmem:[%s4] sm:$0x1]
  %346 = vmatpush.msra.mxu0 %v343
  %347 = vmatpush.msra.mxu0 %v341
  %348 = vmatpush.msra.mxu0 %v339
  %349 = vmatpush.msra.mxu0 %v337
  %350 = vmatpush.msra.mxu0 %v335
  %351 = vmatpush.msra.mxu0 %v333
  %352 = vmatpush.msra.mxu0 %v331
  %353 = vmatpush.msra.mxu0 %v329
  %354 = vmatpush.msra.mxu0 %v327
  %355 = vmatpush.msra.mxu0 %v325
  %356 = vmatpush.msra.mxu0 %v323
  %357 = vmatpush.msra.mxu0 %v321
  %358 = vmatpush.msra.mxu0 %v319
  %359 = vmatpush.msra.mxu0 %v317
  %360 = vmatpush.msra.mxu0 %v315
  %361 = vmatpush.msra.mxu0 %v313
  %362 = vmatmul.f32.gmra.mxu0 %v305
  %v363 = vpop.f32.mrf.mxu0
  %v364 = vadd.f32 0.0, %v363
  %365 = vmatmul.f32.gmra.mxu0 %v306
  %v366 = vpop.f32.mrf.mxu0
  %v367 = vadd.f32 0.0, %v366
  %368 = vmatmul.f32.gmra.mxu0 %v307
  %v369 = vpop.f32.mrf.mxu0
  %v370 = vadd.f32 0.0, %v369
  %371 = vmatmul.f32.gmra.mxu0 %v308
  %v372 = vpop.f32.mrf.mxu0
  %v373 = vadd.f32 0.0, %v372
  %374 = vmatmul.f32.gmra.mxu0 %v309
  %v375 = vpop.f32.mrf.mxu0
  %v376 = vadd.f32 0.0, %v375
  %377 = vmatmul.f32.gmra.mxu0 %v310
  %v378 = vpop.f32.mrf.mxu0
  %v379 = vadd.f32 0.0, %v378
  %380 = vmatmul.f32.gmra.mxu0 %v311
  %v381 = vpop.f32.mrf.mxu0
  %v382 = vadd.f32 0.0, %v381
  %383 = vmatmul.f32.gmra.mxu0 %v312
  %v384 = vpop.f32.mrf.mxu0
  %v385 = vadd.f32 0.0, %v384
  %386 = vdwg.mxu0
  %387 = vmatpush.msra.mxu0 %v344
  %388 = vmatpush.msra.mxu0 %v342
  %389 = vmatpush.msra.mxu0 %v340
  %390 = vmatpush.msra.mxu0 %v338
  %391 = vmatpush.msra.mxu0 %v336
  %392 = vmatpush.msra.mxu0 %v334
  %393 = vmatpush.msra.mxu0 %v332
  %394 = vmatpush.msra.mxu0 %v330
  %395 = vmatpush.msra.mxu0 %v328
  %396 = vmatpush.msra.mxu0 %v326
  %397 = vmatpush.msra.mxu0 %v324
  %398 = vmatpush.msra.mxu0 %v322
  %399 = vmatpush.msra.mxu0 %v320
  %400 = vmatpush.msra.mxu0 %v318
  %401 = vmatpush.msra.mxu0 %v316
  %402 = vmatpush.msra.mxu0 %v314
  %403 = vmatmul.f32.gmra.mxu0 %v305
  %v404 = vpop.f32.mrf.mxu0
  %v405 = vadd.f32 0.0, %v404
  %406 = vmatmul.f32.gmra.mxu0 %v306
  %v407 = vpop.f32.mrf.mxu0
  %v408 = vadd.f32 0.0, %v407
  %409 = vmatmul.f32.gmra.mxu0 %v307
  %v410 = vpop.f32.mrf.mxu0
  %v411 = vadd.f32 0.0, %v410
  %412 = vmatmul.f32.gmra.mxu0 %v308
  %v413 = vpop.f32.mrf.mxu0
  %v414 = vadd.f32 0.0, %v413
  %415 = vmatmul.f32.gmra.mxu0 %v309
  %v416 = vpop.f32.mrf.mxu0
  %v417 = vadd.f32 0.0, %v416
  %418 = vmatmul.f32.gmra.mxu0 %v310
  %v419 = vpop.f32.mrf.mxu0
  %v420 = vadd.f32 0.0, %v419
  %421 = vmatmul.f32.gmra.mxu0 %v311
  %v422 = vpop.f32.mrf.mxu0
  %v423 = vadd.f32 0.0, %v422
  %424 = vmatmul.f32.gmra.mxu0 %v312
  %v425 = vpop.f32.mrf.mxu0
  %v426 = vadd.f32 0.0, %v425
  %427 = vdwg.mxu0
  %428 = vmatpush.msra.mxu0 0.0
  %429 = vmatpush.msra.mxu0 0.0
  %430 = vmatpush.msra.mxu0 0.0
  %431 = vmatpush.msra.mxu0 0.0
  %432 = vmatpush.msra.mxu0 0.0
  %433 = vmatpush.msra.mxu0 0.0
  %434 = vmatpush.msra.mxu0 0.0
  %435 = vmatpush.msra.mxu0 0.0
  %436 = vmatpush.msra.mxu0 %v426
  %437 = vmatpush.msra.mxu0 %v423
  %438 = vmatpush.msra.mxu0 %v420
  %439 = vmatpush.msra.mxu0 %v417
  %440 = vmatpush.msra.mxu0 %v414
  %441 = vmatpush.msra.mxu0 %v411
  %442 = vmatpush.msra.mxu0 %v408
  %443 = vmatpush.msra.mxu0 %v405
  %444 = vmatmul.f32.gmra.mxu0 %v165
  %v445 = vpop.f32.mrf.mxu0
  %v446 = vadd.f32 0.0, %v445
  %447 = vmatmul.f32.gmra.mxu0 %v168
  %v448 = vpop.f32.mrf.mxu0
  %v449 = vadd.f32 0.0, %v448
  %450 = vmatmul.f32.gmra.mxu0 %v171
  %v451 = vpop.f32.mrf.mxu0
  %v452 = vadd.f32 0.0, %v451
  %453 = vmatmul.f32.gmra.mxu0 %v174
  %v454 = vpop.f32.mrf.mxu0
  %v455 = vadd.f32 0.0, %v454
  %456 = vmatmul.f32.gmra.mxu0 %v177
  %v457 = vpop.f32.mrf.mxu0
  %v458 = vadd.f32 0.0, %v457
  %459 = vmatmul.f32.gmra.mxu0 %v180
  %v460 = vpop.f32.mrf.mxu0
  %v461 = vadd.f32 0.0, %v460
  %462 = vmatmul.f32.gmra.mxu0 %v183
  %v463 = vpop.f32.mrf.mxu0
  %v464 = vadd.f32 0.0, %v463
  %465 = vmatmul.f32.gmra.mxu0 %v186
  %v466 = vpop.f32.mrf.mxu0
  %v467 = vadd.f32 0.0, %v466
  %468 = vdwg.mxu0
  %469 = vmatpush.msra.mxu0 0.0
  %470 = vmatpush.msra.mxu0 0.0
  %471 = vmatpush.msra.mxu0 0.0
  %472 = vmatpush.msra.mxu0 0.0
  %473 = vmatpush.msra.mxu0 0.0
  %474 = vmatpush.msra.mxu0 0.0
  %475 = vmatpush.msra.mxu0 0.0
  %476 = vmatpush.msra.mxu0 0.0
  %477 = vmatpush.msra.mxu0 %v385
  %478 = vmatpush.msra.mxu0 %v382
  %479 = vmatpush.msra.mxu0 %v379
  %480 = vmatpush.msra.mxu0 %v376
  %481 = vmatpush.msra.mxu0 %v373
  %482 = vmatpush.msra.mxu0 %v370
  %483 = vmatpush.msra.mxu0 %v367
  %484 = vmatpush.msra.mxu0 %v364
  %485 = vmatmul.f32.gmra.mxu0 %v230
  %v486 = vpop.f32.mrf.mxu0
  %v487 = vadd.f32 %v446, %v486
  %488 = vmatmul.f32.gmra.mxu0 %v233
  %v489 = vpop.f32.mrf.mxu0
  %v490 = vadd.f32 %v449, %v489
  %491 = vmatmul.f32.gmra.mxu0 %v236
  %v492 = vpop.f32.mrf.mxu0
  %v493 = vadd.f32 %v452, %v492
  %494 = vmatmul.f32.gmra.mxu0 %v239
  %v495 = vpop.f32.mrf.mxu0
  %v496 = vadd.f32 %v455, %v495
  %497 = vmatmul.f32.gmra.mxu0 %v242
  %v498 = vpop.f32.mrf.mxu0
  %v499 = vadd.f32 %v458, %v498
  %500 = vmatmul.f32.gmra.mxu0 %v245
  %v501 = vpop.f32.mrf.mxu0
  %v502 = vadd.f32 %v461, %v501
  %503 = vmatmul.f32.gmra.mxu0 %v248
  %v504 = vpop.f32.mrf.mxu0
  %v505 = vadd.f32 %v464, %v504
  %506 = vmatmul.f32.gmra.mxu0 %v251
  %v507 = vpop.f32.mrf.mxu0
  %v508 = vadd.f32 %v467, %v507
  %509 = vdwg.mxu0
  %v511 = vperm.slane %v345, 0
  %v513 = vadd.f32 %v487, %v511
  %v514 = vadd.f32 %v490, %v511
  %v515 = vadd.f32 %v493, %v511
  %v516 = vadd.f32 %v496, %v511
  %v517 = vadd.f32 %v499, %v511
  %v518 = vadd.f32 %v502, %v511
  %v519 = vadd.f32 %v505, %v511
  %v520 = vadd.f32 %v508, %v511
  %v521 = vmax.f32 %v513, 0.0
  %v522 = vmax.f32 %v514, 0.0
  %v523 = vmax.f32 %v515, 0.0
  %v524 = vmax.f32 %v516, 0.0
  %v525 = vmax.f32 %v517, 0.0
  %v526 = vmax.f32 %v518, 0.0
  %v527 = vmax.f32 %v519, 0.0
  %v528 = vmax.f32 %v520, 0.0
  %529 = vst [vmem:[%s6] sm:$0xff] %v521
  %530 = vst [vmem:[%s6 + $0x8] sm:$0xff] %v522
  %531 = vst [vmem:[%s6 + $0x10] sm:$0xff] %v523
  %532 = vst [vmem:[%s6 + $0x18] sm:$0xff] %v524
  %533 = vst [vmem:[%s6 + $0x20] sm:$0xff] %v525
  %534 = vst [vmem:[%s6 + $0x28] sm:$0xff] %v526
  %535 = vst [vmem:[%s6 + $0x30] sm:$0xff] %v527
  %536 = vst [vmem:[%s6 + $0x38] sm:$0xff] %v528
  // Predicated region
  $region26: #{gcn_multirelation_forward.1} parent=0 // pred_check
    _
  $region27: #{gcn_multirelation_forward.1} parent=0 // pred_check_branch
    %538 = sbr.rel (0) target = $region29
  $region28: #{gcn_multirelation_forward.1} parent=0 // pred_region
    _
  $region29: #{gcn_multirelation_forward.1} parent=0 // pred_fallthru
    _
  // Predicated region
  $region30: #{gcn_multirelation_forward.1} parent=0 // pred_check
    _
  $region31: #{gcn_multirelation_forward.1} parent=0 // pred_check_branch
    %540 = sbr.rel (0) target = $region33
  $region32: #{gcn_multirelation_forward.1} parent=0 // pred_region
    _
  $region33: #{gcn_multirelation_forward.1} parent=0 // pred_fallthru
    _

</llo_original>
